<compile_context>
chip_gen: v6e
topology: v6e:2x2x1
jax: 0.10.0
libtpu: 0.0.40
codegen_flags: <defaults>
</compile_context>

<pallas_src>
import jax
import jax.numpy as jnp
import numpy as np
from jax.experimental import pallas as pl
from jax.experimental.pallas import tpu as pltpu


def _identity_dma_kernel(x_hbm, o_hbm, sem):
    # Single HBM->HBM DMA memcpy of the whole tensor: no VMEM staging,
    # no grid, no TensorCore load/store bundles.
    cp = pltpu.make_async_copy(x_hbm, o_hbm, sem)
    cp.start()
    cp.wait()


def identity_inter_set_layer(inputs, *, donate=True):
    """Pallas equivalent of IdentityInterSetLayer.forward.

    The module is a pure identity on input[0].  With donate=True (default)
    no kernel is launched and input[0] is returned directly — this is the
    semantically exact and fastest option.  With donate=False a fresh buffer
    holding the same values is produced via a single HBM->HBM DMA.

    Note: donate=True hands back the same array handle; inside a jit a caller
    that later mutates/donates that handle affects both names (benign here,
    since output == input by definition).
    """
    x = inputs[0]

    # Fast path: identity needs no data movement at all.  Also covers the
    # zero-size edge case (no reshape / cdiv(0, 0) pitfalls).
    if donate or x.size == 0:
        return x

    nbytes = int(x.size) * jnp.dtype(x.dtype).itemsize
    return pl.pallas_call(
        _identity_dma_kernel,
        out_shape=jax.ShapeDtypeStruct(x.shape, x.dtype),
        in_specs=[pl.BlockSpec(memory_space=pl.ANY)],    # raw HBM ref
        out_specs=pl.BlockSpec(memory_space=pl.ANY),     # raw HBM ref
        scratch_shapes=[pltpu.SemaphoreType.DMA],
        cost_estimate=pl.CostEstimate(
            flops=0, transcendentals=0, bytes_accessed=2 * nbytes),
    )(x)


if __name__ == "__main__":
    key = jax.random.PRNGKey(0)
    kx, kp = jax.random.split(key)

    # Small point-transformer-style inputs; forward returns input[0] (the
    # per-point feature tensor x) unchanged.
    num_points = 128
    in_planes = 32           # feature channels (module's in_planes)
    share_planes = 8         # unused by forward (kept for parity with __init__)
    nsample = 16             # unused by forward

    x = jax.random.normal(kx, (num_points, in_planes), dtype=jnp.float32)
    p = jax.random.normal(kp, (num_points, 3), dtype=jnp.float32)
    o = jnp.array([num_points], dtype=jnp.int32)

    x_host = np.asarray(x)

    # 1) Materialized-copy path: exercises the Pallas HBM->HBM DMA kernel.
    out_copy = identity_inter_set_layer((x, p, o), donate=False)
    out_copy = jax.block_until_ready(out_copy)
    assert out_copy.shape == x_host.shape and out_copy.dtype == x_host.dtype
    assert np.array_equal(np.asarray(out_copy), x_host), "DMA copy mismatch"

    # 2) Default fast path: pure identity, no kernel launch.
    out_fast = identity_inter_set_layer((x, p, o), donate=True)
    out_fast = jax.block_until_ready(out_fast)
    assert out_fast.shape == x_host.shape and out_fast.dtype == x_host.dtype
    assert np.array_equal(np.asarray(out_fast), x_host), "identity mismatch"

    print("KERNEL_OK")
</pallas_src>

<mosaic_0001>
module attributes {stable_mosaic.version = 11 : i64} {
  func.func @_identity_dma_kernel(%arg0: memref<128x32xf32, #tpu.memory_space<any>>, %arg1: memref<128x32xf32, #tpu.memory_space<any>>, %arg2: memref<!tpu.dma_semaphore, #tpu.memory_space<semaphore_mem>>) attributes {dimension_semantics = [], scalar_prefetch = 0 : i64, scratch_operands = 1 : i64, tpu.core_type = #tpu.core_type<tc>} {
    tpu.enqueue_dma source(%arg0 : memref<128x32xf32, #tpu.memory_space<any>>) target(%arg1 : memref<128x32xf32, #tpu.memory_space<any>>) target_semaphore(%arg2 : memref<!tpu.dma_semaphore, #tpu.memory_space<semaphore_mem>>)
    tpu.wait_dma2 semaphore(%arg2 : memref<!tpu.dma_semaphore, #tpu.memory_space<semaphore_mem>>) src(%arg0 : memref<128x32xf32, #tpu.memory_space<any>>) dst(%arg1 : memref<128x32xf32, #tpu.memory_space<any>>)
    return
  }
}

</mosaic_0001>

<llo_original>
// kernel: tpu_custom_call.1
$region0: #{tpu_custom_call.1}
  #allocation0 [shape = 'u32[]', space=smem, size = 0x4, offset = 0x4, fixed_abs, tag = 'smem constant byte address 0x4 - core index']
  #allocation1 [shape = 'u32[144,128]{1,0:T(1,128)}', space=vmem, size = 0x12000, scoped, tag = 'internal scratch']
  #allocation2 [shape = 's32[1]{0}', space=sflag, size = 0x4, scoped, tag = 'scratch operand']
  #allocation3 [shape = 's32[]', space=sflag, size = 0x4, offset = 0, fixed_abs, tag = 'sflag constant byte address 0x0 - dummy sync flag']
  %s0 = inlined_call_operand.vmem [shape: f32[128,32], index: 0, kind: input, shape index: {}]
  %s1 = inlined_call_operand.vmem [shape: f32[128,32], index: 1, kind: output, shape index: {}]
  %s2 = sld [smem:[#allocation0]]
  $region36: #{tpu_custom_call.1} parent=0
    _
  %s4 = ssub.s32 1, %s2
  %s5 = scalar_select 0, %s4, %s2
  %p7 = scmp.lt.u32.totalorder 128, 8
  %p8 = pneg %p7
  // Predicated region
  $region2: #{tpu_custom_call.1} parent=0 // pred_check
    _
  $region3: #{tpu_custom_call.1} parent=0 // pred_check_branch
    %10 = sbr.rel (%p7) target = $region5
  $region4: #{tpu_custom_call.1} parent=0 // pred_region
    %s26 = sand.u32 128, 7
    %p27 = scmp.eq.s32.totalorder %s26, 0
    // Predicated region
    $region17: #{tpu_custom_call.1} parent=4 // pred_check
      %p28 = pneg %p27
    $region18: #{tpu_custom_call.1} parent=4 // pred_check_branch
      %30 = sbr.rel (%p28) target = $region20
    $region19: #{tpu_custom_call.1} parent=4 // pred_region
      loop: start=0, step=1, limit=1
      $region21: #{tpu_custom_call.1} parent=19 // loop_pre_header
        _
      $region22: #{tpu_custom_call.1} parent=19 // loop_header
        %s32 = sphi 0, %s36
        %p33 = scmp.ge.s32.totalorder %s32, 1
        %s37 = sphi %s0, %s0
        %s38 = sphi %s1, %s1
      $region23: #{tpu_custom_call.1} parent=19 // loop_header_branch
        %35 = sbr.rel (%p33) target = $region27
      $region24: #{tpu_custom_call.1} parent=19 // loop_body
        %v39 = vld [vmem:[%s37] sm:$0xff]
        %40 = vst [vmem:[%s38] sm:$0xff] %v39
        %v41 = vld [vmem:[%s37 + $0x8] sm:$0xff]
        %42 = vst [vmem:[%s38 + $0x8] sm:$0xff] %v41
        %v43 = vld [vmem:[%s37 + $0x10] sm:$0xff]
        %44 = vst [vmem:[%s38 + $0x10] sm:$0xff] %v43
        %v45 = vld [vmem:[%s37 + $0x18] sm:$0xff]
        %46 = vst [vmem:[%s38 + $0x18] sm:$0xff] %v45
        %v47 = vld [vmem:[%s37 + $0x20] sm:$0xff]
        %48 = vst [vmem:[%s38 + $0x20] sm:$0xff] %v47
        %v49 = vld [vmem:[%s37 + $0x28] sm:$0xff]
        %50 = vst [vmem:[%s38 + $0x28] sm:$0xff] %v49
        %v51 = vld [vmem:[%s37 + $0x30] sm:$0xff]
        %52 = vst [vmem:[%s38 + $0x30] sm:$0xff] %v51
        %v53 = vld [vmem:[%s37 + $0x38] sm:$0xff]
        %54 = vst [vmem:[%s38 + $0x38] sm:$0xff] %v53
        %v55 = vld [vmem:[%s37 + $0x40] sm:$0xff]
        %56 = vst [vmem:[%s38 + $0x40] sm:$0xff] %v55
        %v57 = vld [vmem:[%s37 + $0x48] sm:$0xff]
        %58 = vst [vmem:[%s38 + $0x48] sm:$0xff] %v57
        %v59 = vld [vmem:[%s37 + $0x50] sm:$0xff]
        %60 = vst [vmem:[%s38 + $0x50] sm:$0xff] %v59
        %v61 = vld [vmem:[%s37 + $0x58] sm:$0xff]
        %62 = vst [vmem:[%s38 + $0x58] sm:$0xff] %v61
        %v63 = vld [vmem:[%s37 + $0x60] sm:$0xff]
        %64 = vst [vmem:[%s38 + $0x60] sm:$0xff] %v63
        %v65 = vld [vmem:[%s37 + $0x68] sm:$0xff]
        %66 = vst [vmem:[%s38 + $0x68] sm:$0xff] %v65
        %v67 = vld [vmem:[%s37 + $0x70] sm:$0xff]
        %68 = vst [vmem:[%s38 + $0x70] sm:$0xff] %v67
        %v69 = vld [vmem:[%s37 + $0x78] sm:$0xff]
        %70 = vst [vmem:[%s38 + $0x78] sm:$0xff] %v69
      $region25: #{tpu_custom_call.1} parent=19 // loop_footer
        %s36 = sadd.s32 1, %s32
      $region26: #{tpu_custom_call.1} parent=19 // loop_footer_branch
        %31 = sbr.rel target = $region22
      $region27: #{tpu_custom_call.1} parent=19 // loop_exit
        _
    $region20: #{tpu_custom_call.1} parent=4 // pred_fallthru
      _
    %p71 = pneg %p27
    // Predicated region
    $region28: #{tpu_custom_call.1} parent=4 // pred_check
      _
    $region29: #{tpu_custom_call.1} parent=4 // pred_check_branch
      %73 = sbr.rel (%p27) target = $region31
    $region30: #{tpu_custom_call.1} parent=4 // pred_region
      %s74 = sand.u32 128, 7
    $region31: #{tpu_custom_call.1} parent=4 // pred_fallthru
      _
  $region5: #{tpu_custom_call.1} parent=0 // pred_fallthru
    _
  // Predicated region
  $region6: #{tpu_custom_call.1} parent=0 // pred_check
    %p11 = pneg %p7
  $region7: #{tpu_custom_call.1} parent=0 // pred_check_branch
    %13 = sbr.rel (%p11) target = $region9
  $region8: #{tpu_custom_call.1} parent=0 // pred_region
    %s14 = sshll.u32 1, 128
    %s15 = ssub.s32 %s14, 1
    loop: start=0, step=1, limit=1
    $region10: #{tpu_custom_call.1} parent=8 // loop_pre_header
      _
    $region11: #{tpu_custom_call.1} parent=8 // loop_header
      %s17 = sphi 0, %s21
      %p18 = scmp.ge.s32.totalorder %s17, 1
      %s22 = sphi %s0, %s0
      %s23 = sphi %s1, %s1
    $region12: #{tpu_custom_call.1} parent=8 // loop_header_branch
      %20 = sbr.rel (%p18) target = $region16
    $region13: #{tpu_custom_call.1} parent=8 // loop_body
      %v24 = vld [vmem:[%s22] sm:%s15]
      %25 = vst [vmem:[%s23] sm:%s15] %v24
    $region14: #{tpu_custom_call.1} parent=8 // loop_footer
      %s21 = sadd.s32 1, %s17
    $region15: #{tpu_custom_call.1} parent=8 // loop_footer_branch
      %16 = sbr.rel target = $region11
    $region16: #{tpu_custom_call.1} parent=8 // loop_exit
      _
  $region9: #{tpu_custom_call.1} parent=0 // pred_fallthru
    _
  // Predicated region
  $region32: #{tpu_custom_call.1} parent=0 // pred_check
    _
  $region33: #{tpu_custom_call.1} parent=0 // pred_check_branch
    %77 = sbr.rel (0) target = $region35
  $region34: #{tpu_custom_call.1} parent=0 // pred_region
    %78 = vsyncadd [#allocation2], 2048
  $region35: #{tpu_custom_call.1} parent=0 // pred_fallthru
    _
  %s79 = smul.u32 128, 1
  %s80 = sshll.u32 %s79, 4
  %81 = dma.done [#allocation2], %s80
  %82 = vsyncmov [#allocation2]
  %s83 = vpop.sfrf %82
  %p84 = scmp.eq.s32.totalorder %s83, 0
  %p85 = pneg %p84
  %87 = shalt.err (%p85)

</llo_original>
